<compile_context>
chip_gen: v6e
topology: v6e:2x2x1
jax: 0.10.0
libtpu: 0.0.40
codegen_flags: <defaults>
</compile_context>

<pallas_src>
import jax
import jax.numpy as jnp
from jax.experimental import pallas as pl
from jax.experimental.pallas import tpu as pltpu

EPS = 1e-5

# ---------------------------------------------------------------------------
# Packed-parameter layout: one contiguous (264, 32) f32 buffer.
#   name -> (row_offset, n_rows, n_cols); all weights are (Fout, Fin), all
#   vectors (bias / gamma / beta) are (F, 1)  -- same as torch.nn layouts.
# ---------------------------------------------------------------------------
_PACK_COLS = 32
_PACK_ROWS = 264  # 258 used rows, padded up to a multiple of 8
_LAYOUT = {
    "w1": (0, 16, 1),    "b1": (16, 16, 1),  "g1": (32, 16, 1),  "be1": (48, 16, 1),
    "w2": (64, 32, 16),  "b2": (96, 32, 1),  "g2": (128, 32, 1), "be2": (160, 32, 1),
    "w3": (192, 16, 32), "b3": (208, 16, 1), "g3": (224, 16, 1), "be3": (240, 16, 1),
    "w4": (256, 1, 16),  "b4": (257, 1, 1),
}
_PARAM_ORDER = ["w1", "b1", "g1", "be1",
                "w2", "b2", "g2", "be2",
                "w3", "b3", "g3", "be3",
                "w4", "b4"]


def pack_params(params):
    """Pack the 14 parameter arrays (in _PARAM_ORDER) into one (264, 32) buffer."""
    buf = jnp.zeros((_PACK_ROWS, _PACK_COLS), jnp.float32)
    for name, p in zip(_PARAM_ORDER, params):
        off, r, c = _LAYOUT[name]
        assert p.shape == (r, c), (name, p.shape, (r, c))
        buf = buf.at[off:off + r, 0:c].set(p.astype(jnp.float32))
    return buf


def _param(p_ref, name):
    off, r, c = _LAYOUT[name]
    return p_ref[off:off + r, 0:c]   # static slice of the packed VMEM tile


# ---------------------------------------------------------------------------
# Kernel
# ---------------------------------------------------------------------------
def mainnet_kernel(x_ref, p_ref, o_ref):
    n = x_ref.shape[-1]
    inv_n = jnp.float32(1.0 / n)
    ones_n = jnp.ones((n, 1), jnp.float32)   # batch-axis reduction vector (MXU)

    def bn_relu(h, g, be):
        # BatchNorm1d training-mode stats over the batch (lane) axis, computed
        # on the MXU: per-feature sum and centered sum-of-squares as (F,N)@(N,1).
        mu = jnp.dot(h, ones_n, preferred_element_type=jnp.float32) * inv_n
        d = h - mu
        var = jnp.dot(d * d, ones_n, preferred_element_type=jnp.float32) * inv_n
        hn = d * jax.lax.rsqrt(var + EPS)
        return jnp.maximum(hn * g + be, 0.0)

    x = x_ref[...].astype(jnp.float32)                       # (1, N) lane-dense

    # Layer 1: Linear(1, 16).  K == 1 -> pure VPU broadcast FMA (outer product),
    # no MXU pass / result-FIFO drain.
    h = _param(p_ref, "w1") * x + _param(p_ref, "b1")        # (16, N)
    h = bn_relu(h, _param(p_ref, "g1"), _param(p_ref, "be1"))

    # Layer 2: Linear(16, 32) -> W @ H on the MXU.
    h = jnp.dot(_param(p_ref, "w2"), h,
                preferred_element_type=jnp.float32) + _param(p_ref, "b2")   # (32, N)
    h = bn_relu(h, _param(p_ref, "g2"), _param(p_ref, "be2"))

    # Layer 3: Linear(32, 16)
    h = jnp.dot(_param(p_ref, "w3"), h,
                preferred_element_type=jnp.float32) + _param(p_ref, "b3")   # (16, N)
    h = bn_relu(h, _param(p_ref, "g3"), _param(p_ref, "be3"))

    # Layer 4: Linear(16, 1) -> lane-dense (1, N) output row.
    out = jnp.dot(_param(p_ref, "w4"), h,
                  preferred_element_type=jnp.float32) + _param(p_ref, "b4")  # (1, N)
    o_ref[...] = out.astype(o_ref.dtype)


# ---------------------------------------------------------------------------
# Wrapper
# ---------------------------------------------------------------------------
def mainnet_forward(x, packed_params):
    """x: (N, 1) float32 (PyTorch nn.Linear layout). Returns (N, 1) float32."""
    n = x.shape[0]
    x_fm = x.reshape(1, n)   # feature-major: batch along the 128-wide lane axis

    out_fm = pl.pallas_call(
        mainnet_kernel,
        out_shape=jax.ShapeDtypeStruct((1, n), jnp.float32),
        grid_spec=pl.GridSpec(
            grid=(),  # whole batch resident in VMEM (BatchNorm needs global stats)
            in_specs=[
                pl.BlockSpec((1, n), lambda: (0, 0), memory_space=pltpu.VMEM),
                pl.BlockSpec((_PACK_ROWS, _PACK_COLS), lambda: (0, 0),
                             memory_space=pltpu.VMEM),
            ],
            out_specs=pl.BlockSpec((1, n), lambda: (0, 0),
                                   memory_space=pltpu.VMEM),
        ),
        compiler_params=pltpu.CompilerParams(
            vmem_limit_bytes=32 * 1024 * 1024),
    )(x_fm, packed_params)

    return out_fm.reshape(n, 1)


# ---------------------------------------------------------------------------
# Params / reference
# ---------------------------------------------------------------------------
def init_params():
    """PyTorch-default-like init, in torch layouts: Linear W (Fout, Fin) and
    b (Fout, 1) ~ U(-1/sqrt(fan_in), 1/sqrt(fan_in)); BN gamma = 1, beta = 0."""
    key = jax.random.PRNGKey(0)
    dims = [(1, 16), (16, 32), (32, 16), (16, 1)]
    bn_after = [True, True, True, False]
    params = []
    for (fin, fout), has_bn in zip(dims, bn_after):
        key, kw, kb = jax.random.split(key, 3)
        bound = 1.0 / (fin ** 0.5)
        w = jax.random.uniform(kw, (fout, fin), jnp.float32, -bound, bound)
        b = jax.random.uniform(kb, (fout, 1), jnp.float32, -bound, bound)
        params += [w, b]
        if has_bn:
            params += [jnp.ones((fout, 1), jnp.float32),    # gamma
                       jnp.zeros((fout, 1), jnp.float32)]   # beta
    return params


def reference_forward(x, params):
    """Plain-JAX reference in the PyTorch (N, F) convention."""
    (w1, b1, g1, be1, w2, b2, g2, be2, w3, b3, g3, be3, w4, b4) = params

    def bn_relu(h, g, be):
        mu = h.mean(axis=0, keepdims=True)
        var = ((h - mu) ** 2).mean(axis=0, keepdims=True)
        return jnp.maximum((h - mu) / jnp.sqrt(var + EPS) * g.T + be.T, 0.0)

    h = x @ w1.T + b1.T
    h = bn_relu(h, g1, be1)
    h = h @ w2.T + b2.T
    h = bn_relu(h, g2, be2)
    h = h @ w3.T + b3.T
    h = bn_relu(h, g3, be3)
    return h @ w4.T + b4.T


if __name__ == "__main__":
    N = 256  # small, lane-aligned batch (same spirit as the script's arange(100)/200)
    x = (jnp.arange(N, dtype=jnp.float32) / (2.0 * N)).reshape(N, 1)

    params = init_params()            # uses jax.random.PRNGKey(0)
    packed = pack_params(params)

    out = mainnet_forward(x, packed)
    out = jax.block_until_ready(out)

    ref = reference_forward(x, params)
    assert out.shape == (N, 1)
    assert jnp.allclose(out, ref, atol=1e-4, rtol=1e-4), (out, ref)

    print("KERNEL_OK")
</pallas_src>

<mosaic_0001>
module attributes {stable_mosaic.version = 11 : i64} {
  func.func @mainnet_kernel(%arg0: memref<1x256xf32, #tpu.memory_space<vmem>>, %arg1: memref<264x32xf32, #tpu.memory_space<vmem>>, %arg2: memref<1x256xf32, #tpu.memory_space<vmem>>) attributes {dimension_semantics = [], scalar_prefetch = 0 : i64, scratch_operands = 0 : i64, tpu.core_type = #tpu.core_type<tc>} {
    %cst = arith.constant 1.000000e+00 : f32
    %0 = vector.broadcast %cst : f32 to vector<256x1xf32>
    %c0 = arith.constant 0 : index
    %c0_0 = arith.constant 0 : index
    %1 = vector.load %arg0[%c0, %c0_0] : memref<1x256xf32, #tpu.memory_space<vmem>>, vector<1x256xf32>
    %c0_1 = arith.constant 0 : index
    %c0_2 = arith.constant 0 : index
    %2 = vector.load %arg1[%c0_1, %c0_2] : memref<264x32xf32, #tpu.memory_space<vmem>>, vector<16x1xf32>
    %3 = vector.broadcast %2 : vector<16x1xf32> to vector<16x256xf32>
    %4 = vector.broadcast %1 : vector<1x256xf32> to vector<16x256xf32>
    %5 = arith.mulf %3, %4 : vector<16x256xf32>
    %c16 = arith.constant 16 : index
    %c0_3 = arith.constant 0 : index
    %6 = vector.load %arg1[%c16, %c0_3] : memref<264x32xf32, #tpu.memory_space<vmem>>, vector<16x1xf32>
    %7 = vector.broadcast %6 : vector<16x1xf32> to vector<16x256xf32>
    %8 = arith.addf %5, %7 : vector<16x256xf32>
    %c32 = arith.constant 32 : index
    %c0_4 = arith.constant 0 : index
    %9 = vector.load %arg1[%c32, %c0_4] : memref<264x32xf32, #tpu.memory_space<vmem>>, vector<16x1xf32>
    %c48 = arith.constant 48 : index
    %c0_5 = arith.constant 0 : index
    %10 = vector.load %arg1[%c48, %c0_5] : memref<264x32xf32, #tpu.memory_space<vmem>>, vector<16x1xf32>
    %cst_6 = arith.constant dense<0.000000e+00> : vector<16x1xf32>
    %11 = tpu.matmul %8, %0, %cst_6 {dimension_numbers = #tpu.dot_dimension_numbers<[1], [0], [0], [1], [0, 0, 1, 1], [], []>} : vector<16x256xf32>, vector<256x1xf32>, vector<16x1xf32> -> vector<16x1xf32>
    %cst_7 = arith.constant 3.906250e-03 : f32
    %12 = vector.broadcast %cst_7 : f32 to vector<16x1xf32>
    %13 = arith.mulf %11, %12 : vector<16x1xf32>
    %14 = vector.broadcast %13 : vector<16x1xf32> to vector<16x256xf32>
    %15 = arith.subf %8, %14 : vector<16x256xf32>
    %16 = arith.mulf %15, %15 : vector<16x256xf32>
    %cst_8 = arith.constant dense<0.000000e+00> : vector<16x1xf32>
    %17 = tpu.matmul %16, %0, %cst_8 {dimension_numbers = #tpu.dot_dimension_numbers<[1], [0], [0], [1], [0, 0, 1, 1], [], []>} : vector<16x256xf32>, vector<256x1xf32>, vector<16x1xf32> -> vector<16x1xf32>
    %cst_9 = arith.constant 3.906250e-03 : f32
    %18 = vector.broadcast %cst_9 : f32 to vector<16x1xf32>
    %19 = arith.mulf %17, %18 : vector<16x1xf32>
    %cst_10 = arith.constant 9.99999974E-6 : f32
    %20 = vector.broadcast %cst_10 : f32 to vector<16x1xf32>
    %21 = arith.addf %19, %20 : vector<16x1xf32>
    %22 = math.rsqrt %21 : vector<16x1xf32>
    %23 = vector.broadcast %22 : vector<16x1xf32> to vector<16x256xf32>
    %24 = arith.mulf %15, %23 : vector<16x256xf32>
    %25 = vector.broadcast %9 : vector<16x1xf32> to vector<16x256xf32>
    %26 = arith.mulf %24, %25 : vector<16x256xf32>
    %27 = vector.broadcast %10 : vector<16x1xf32> to vector<16x256xf32>
    %28 = arith.addf %26, %27 : vector<16x256xf32>
    %cst_11 = arith.constant 0.000000e+00 : f32
    %29 = vector.broadcast %cst_11 : f32 to vector<16x256xf32>
    %30 = arith.maximumf %28, %29 : vector<16x256xf32>
    %c64 = arith.constant 64 : index
    %c0_12 = arith.constant 0 : index
    %31 = vector.load %arg1[%c64, %c0_12] : memref<264x32xf32, #tpu.memory_space<vmem>>, vector<32x16xf32>
    %cst_13 = arith.constant dense<0.000000e+00> : vector<32x256xf32>
    %32 = tpu.matmul %31, %30, %cst_13 {dimension_numbers = #tpu.dot_dimension_numbers<[1], [0], [0], [1], [0, 0, 1, 1], [], []>} : vector<32x16xf32>, vector<16x256xf32>, vector<32x256xf32> -> vector<32x256xf32>
    %c96 = arith.constant 96 : index
    %c0_14 = arith.constant 0 : index
    %33 = vector.load %arg1[%c96, %c0_14] : memref<264x32xf32, #tpu.memory_space<vmem>>, vector<32x1xf32>
    %34 = vector.broadcast %33 : vector<32x1xf32> to vector<32x256xf32>
    %35 = arith.addf %32, %34 : vector<32x256xf32>
    %c128 = arith.constant 128 : index
    %c0_15 = arith.constant 0 : index
    %36 = vector.load %arg1[%c128, %c0_15] : memref<264x32xf32, #tpu.memory_space<vmem>>, vector<32x1xf32>
    %c160 = arith.constant 160 : index
    %c0_16 = arith.constant 0 : index
    %37 = vector.load %arg1[%c160, %c0_16] : memref<264x32xf32, #tpu.memory_space<vmem>>, vector<32x1xf32>
    %cst_17 = arith.constant dense<0.000000e+00> : vector<32x1xf32>
    %38 = tpu.matmul %35, %0, %cst_17 {dimension_numbers = #tpu.dot_dimension_numbers<[1], [0], [0], [1], [0, 0, 1, 1], [], []>} : vector<32x256xf32>, vector<256x1xf32>, vector<32x1xf32> -> vector<32x1xf32>
    %cst_18 = arith.constant 3.906250e-03 : f32
    %39 = vector.broadcast %cst_18 : f32 to vector<32x1xf32>
    %40 = arith.mulf %38, %39 : vector<32x1xf32>
    %41 = vector.broadcast %40 : vector<32x1xf32> to vector<32x256xf32>
    %42 = arith.subf %35, %41 : vector<32x256xf32>
    %43 = arith.mulf %42, %42 : vector<32x256xf32>
    %cst_19 = arith.constant dense<0.000000e+00> : vector<32x1xf32>
    %44 = tpu.matmul %43, %0, %cst_19 {dimension_numbers = #tpu.dot_dimension_numbers<[1], [0], [0], [1], [0, 0, 1, 1], [], []>} : vector<32x256xf32>, vector<256x1xf32>, vector<32x1xf32> -> vector<32x1xf32>
    %cst_20 = arith.constant 3.906250e-03 : f32
    %45 = vector.broadcast %cst_20 : f32 to vector<32x1xf32>
    %46 = arith.mulf %44, %45 : vector<32x1xf32>
    %cst_21 = arith.constant 9.99999974E-6 : f32
    %47 = vector.broadcast %cst_21 : f32 to vector<32x1xf32>
    %48 = arith.addf %46, %47 : vector<32x1xf32>
    %49 = math.rsqrt %48 : vector<32x1xf32>
    %50 = vector.broadcast %49 : vector<32x1xf32> to vector<32x256xf32>
    %51 = arith.mulf %42, %50 : vector<32x256xf32>
    %52 = vector.broadcast %36 : vector<32x1xf32> to vector<32x256xf32>
    %53 = arith.mulf %51, %52 : vector<32x256xf32>
    %54 = vector.broadcast %37 : vector<32x1xf32> to vector<32x256xf32>
    %55 = arith.addf %53, %54 : vector<32x256xf32>
    %cst_22 = arith.constant 0.000000e+00 : f32
    %56 = vector.broadcast %cst_22 : f32 to vector<32x256xf32>
    %57 = arith.maximumf %55, %56 : vector<32x256xf32>
    %c192 = arith.constant 192 : index
    %c0_23 = arith.constant 0 : index
    %58 = vector.load %arg1[%c192, %c0_23] : memref<264x32xf32, #tpu.memory_space<vmem>>, vector<16x32xf32>
    %cst_24 = arith.constant dense<0.000000e+00> : vector<16x256xf32>
    %59 = tpu.matmul %58, %57, %cst_24 {dimension_numbers = #tpu.dot_dimension_numbers<[1], [0], [0], [1], [0, 0, 1, 1], [], []>} : vector<16x32xf32>, vector<32x256xf32>, vector<16x256xf32> -> vector<16x256xf32>
    %c208 = arith.constant 208 : index
    %c0_25 = arith.constant 0 : index
    %60 = vector.load %arg1[%c208, %c0_25] : memref<264x32xf32, #tpu.memory_space<vmem>>, vector<16x1xf32>
    %61 = vector.broadcast %60 : vector<16x1xf32> to vector<16x256xf32>
    %62 = arith.addf %59, %61 : vector<16x256xf32>
    %c224 = arith.constant 224 : index
    %c0_26 = arith.constant 0 : index
    %63 = vector.load %arg1[%c224, %c0_26] : memref<264x32xf32, #tpu.memory_space<vmem>>, vector<16x1xf32>
    %c240 = arith.constant 240 : index
    %c0_27 = arith.constant 0 : index
    %64 = vector.load %arg1[%c240, %c0_27] : memref<264x32xf32, #tpu.memory_space<vmem>>, vector<16x1xf32>
    %cst_28 = arith.constant dense<0.000000e+00> : vector<16x1xf32>
    %65 = tpu.matmul %62, %0, %cst_28 {dimension_numbers = #tpu.dot_dimension_numbers<[1], [0], [0], [1], [0, 0, 1, 1], [], []>} : vector<16x256xf32>, vector<256x1xf32>, vector<16x1xf32> -> vector<16x1xf32>
    %cst_29 = arith.constant 3.906250e-03 : f32
    %66 = vector.broadcast %cst_29 : f32 to vector<16x1xf32>
    %67 = arith.mulf %65, %66 : vector<16x1xf32>
    %68 = vector.broadcast %67 : vector<16x1xf32> to vector<16x256xf32>
    %69 = arith.subf %62, %68 : vector<16x256xf32>
    %70 = arith.mulf %69, %69 : vector<16x256xf32>
    %cst_30 = arith.constant dense<0.000000e+00> : vector<16x1xf32>
    %71 = tpu.matmul %70, %0, %cst_30 {dimension_numbers = #tpu.dot_dimension_numbers<[1], [0], [0], [1], [0, 0, 1, 1], [], []>} : vector<16x256xf32>, vector<256x1xf32>, vector<16x1xf32> -> vector<16x1xf32>
    %cst_31 = arith.constant 3.906250e-03 : f32
    %72 = vector.broadcast %cst_31 : f32 to vector<16x1xf32>
    %73 = arith.mulf %71, %72 : vector<16x1xf32>
    %cst_32 = arith.constant 9.99999974E-6 : f32
    %74 = vector.broadcast %cst_32 : f32 to vector<16x1xf32>
    %75 = arith.addf %73, %74 : vector<16x1xf32>
    %76 = math.rsqrt %75 : vector<16x1xf32>
    %77 = vector.broadcast %76 : vector<16x1xf32> to vector<16x256xf32>
    %78 = arith.mulf %69, %77 : vector<16x256xf32>
    %79 = vector.broadcast %63 : vector<16x1xf32> to vector<16x256xf32>
    %80 = arith.mulf %78, %79 : vector<16x256xf32>
    %81 = vector.broadcast %64 : vector<16x1xf32> to vector<16x256xf32>
    %82 = arith.addf %80, %81 : vector<16x256xf32>
    %cst_33 = arith.constant 0.000000e+00 : f32
    %83 = vector.broadcast %cst_33 : f32 to vector<16x256xf32>
    %84 = arith.maximumf %82, %83 : vector<16x256xf32>
    %c256 = arith.constant 256 : index
    %c0_34 = arith.constant 0 : index
    %85 = vector.load %arg1[%c256, %c0_34] : memref<264x32xf32, #tpu.memory_space<vmem>>, vector<1x16xf32>
    %cst_35 = arith.constant dense<0.000000e+00> : vector<1x256xf32>
    %86 = tpu.matmul %85, %84, %cst_35 {dimension_numbers = #tpu.dot_dimension_numbers<[1], [0], [0], [1], [0, 0, 1, 1], [], []>} : vector<1x16xf32>, vector<16x256xf32>, vector<1x256xf32> -> vector<1x256xf32>
    %c257 = arith.constant 257 : index
    %c0_36 = arith.constant 0 : index
    %87 = vector.load %arg1[%c257, %c0_36] : memref<264x32xf32, #tpu.memory_space<vmem>>, vector<1x1xf32>
    %88 = vector.broadcast %87 : vector<1x1xf32> to vector<1x256xf32>
    %89 = arith.addf %86, %88 : vector<1x256xf32>
    %c0_37 = arith.constant 0 : index
    %c0_38 = arith.constant 0 : index
    %90 = vector.load %arg2[%c0_37, %c0_38] : memref<1x256xf32, #tpu.memory_space<vmem>>, vector<1x256xf32>
    tpu.vector_store %arg2[%c0_37, %c0_38], %89 {strides = array<i32>} : memref<1x256xf32, #tpu.memory_space<vmem>>, vector<1x256xf32>,
    return
  }
}

</mosaic_0001>

<llo_original>
// kernel: tpu_custom_call.1
$region0: #{tpu_custom_call.1}
  #allocation0 [shape = 'u32[]', space=smem, size = 0x4, offset = 0x4, fixed_abs, tag = 'smem constant byte address 0x4 - core index']
  #allocation1 [shape = 'u32[144,128]{1,0:T(1,128)}', space=vmem, size = 0x12000, scoped, tag = 'internal scratch']
  %s0 = inlined_call_operand.vmem [shape: f32[1,256], index: 0, kind: input, shape index: {}]
  %s1 = inlined_call_operand.vmem [shape: f32[264,32], index: 1, kind: input, shape index: {}]
  %s2 = inlined_call_operand.hbm [shape: f32[1,256], index: 2, kind: output, shape index: {}]
  %s3 = sld [smem:[#allocation0]]
  $region18: #{tpu_custom_call.1} parent=0
    _
  %s5 = ssub.s32 1, %s3
  %s6 = scalar_select 0, %s5, %s3
  $region1: #{tpu_custom_call.1} parent=0
    #allocation2 [shape = 'u8[1024]{0}', space=vmem, size = 0x400, scoped, tag = 'output window, operand 0, single buffered']
    #allocation3 [shape = 's32[1]{0}', space=sflag, size = 0x4, scoped, tag = 'scoped memory for tpu_custom_call.1']
    %7 = vsyncpa [#allocation3], 0
    // Predicated region
    $region2: #{tpu_custom_call.1} parent=1 // pred_check
      _
    $region3: #{tpu_custom_call.1} parent=1 // pred_check_branch
      %9 = sbr.rel (0) target = $region5
    $region4: #{tpu_custom_call.1} parent=1 // pred_region
      _
    $region5: #{tpu_custom_call.1} parent=1 // pred_fallthru
      _
    // Predicated region
    $region6: #{tpu_custom_call.1} parent=1 // pred_check
      _
    $region7: #{tpu_custom_call.1} parent=1 // pred_check_branch
      %11 = sbr.rel (0) target = $region9
    $region8: #{tpu_custom_call.1} parent=1 // pred_region
      _
    $region9: #{tpu_custom_call.1} parent=1 // pred_fallthru
      _
    %v12 = vld [vmem:[%s0] sm:$0x3]
    %v13 = vld [vmem:[%s1] sm:$0xff]
    %v14 = vld [vmem:[%s1 + $0x8] sm:$0xff]
    %16 = vset.pattern.permute.xlu0 0
    %17 = vperm.xlu0 %16, %v13
    %v18 = vpop.permute.xlu0 %17
    %21 = vset.pattern.permute.xlu0 0
    %22 = vperm.xlu0 %21, %v14
    %v23 = vpop.permute.xlu0 %22
    %v26 = vlaneseq
    %v27 = vshrl.u32 %v26, 7
    %v28 = vsub.s32 0, %v27
    %v29 = vrot.slane %v12, %v28
    %v30 = vlaneseq
    %v31 = vshrl.u32 %v30, 7
    %v32 = vsub.s32 1, %v31
    %v33 = vrot.slane %v12, %v32
    %v36 = vmul.f32 %v18, %v29
    %v37 = vmul.f32 %v18, %v33
    %v38 = vmul.f32 %v23, %v29
    %v39 = vmul.f32 %v23, %v33
    %v40 = vld [vmem:[%s1 + $0x10] sm:$0xff]
    %v41 = vld [vmem:[%s1 + $0x18] sm:$0xff]
    %43 = vset.pattern.permute.xlu0 0
    %44 = vperm.xlu0 %43, %v40
    %v45 = vpop.permute.xlu0 %44
    %48 = vset.pattern.permute.xlu0 0
    %49 = vperm.xlu0 %48, %v41
    %v50 = vpop.permute.xlu0 %49
    %v52 = vadd.f32 %v36, %v45
    %v53 = vadd.f32 %v37, %v45
    %v54 = vadd.f32 %v38, %v50
    %v55 = vadd.f32 %v39, %v50
    %v56 = vld [vmem:[%s1 + $0x20] sm:$0xff]
    %v57 = vld [vmem:[%s1 + $0x28] sm:$0xff]
    %v58 = vld [vmem:[%s1 + $0x30] sm:$0xff]
    %v59 = vld [vmem:[%s1 + $0x38] sm:$0xff]
    %60 = vmatprep.subr.mxu0 0.0
    %61 = vmatpush1.msra.mxu0 1.0
    %62 = vmatprep.subr.mxu0 0.0
    %63 = vmatpush1.msra.mxu0 1.0
    %64 = vmatprep.subr.mxu0 0.0
    %65 = vmatpush1.msra.mxu0 1.0
    %66 = vmatprep.subr.mxu0 0.0
    %67 = vmatpush1.msra.mxu0 1.0
    %68 = vmatprep.subr.mxu0 0.0
    %69 = vmatpush1.msra.mxu0 1.0
    %70 = vmatprep.subr.mxu0 0.0
    %71 = vmatpush1.msra.mxu0 1.0
    %72 = vmatprep.subr.mxu0 0.0
    %73 = vmatpush1.msra.mxu0 1.0
    %74 = vmatprep.subr.mxu0 0.0
    %75 = vmatpush1.msra.mxu0 1.0
    %76 = vmatprep.subr.mxu0 0.0
    %77 = vmatpush1.msra.mxu0 1.0
    %78 = vmatprep.subr.mxu0 0.0
    %79 = vmatpush1.msra.mxu0 1.0
    %80 = vmatprep.subr.mxu0 0.0
    %81 = vmatpush1.msra.mxu0 1.0
    %82 = vmatprep.subr.mxu0 0.0
    %83 = vmatpush1.msra.mxu0 1.0
    %84 = vmatprep.subr.mxu0 0.0
    %85 = vmatpush1.msra.mxu0 1.0
    %86 = vmatprep.subr.mxu0 0.0
    %87 = vmatpush1.msra.mxu0 1.0
    %88 = vmatprep.subr.mxu0 0.0
    %89 = vmatpush1.msra.mxu0 1.0
    %90 = vmatprep.subr.mxu0 0.0
    %91 = vmatpush1.msra.mxu0 1.0
    %92 = vmatprep.subr.mxu0 0.0
    %93 = vmatpush2.msra.mxu0 1.0
    %94 = vmatprep.subr.mxu0 0.0
    %95 = vmatpush2.msra.mxu0 1.0
    %96 = vmatprep.subr.mxu0 0.0
    %97 = vmatpush2.msra.mxu0 1.0
    %98 = vmatprep.subr.mxu0 0.0
    %99 = vmatpush2.msra.mxu0 1.0
    %100 = vmatprep.subr.mxu0 0.0
    %101 = vmatpush2.msra.mxu0 1.0
    %102 = vmatprep.subr.mxu0 0.0
    %103 = vmatpush2.msra.mxu0 1.0
    %104 = vmatprep.subr.mxu0 0.0
    %105 = vmatpush2.msra.mxu0 1.0
    %106 = vmatprep.subr.mxu0 0.0
    %107 = vmatpush2.msra.mxu0 1.0
    %108 = vmatprep.subr.mxu0 0.0
    %109 = vmatpush2.msra.mxu0 1.0
    %110 = vmatprep.subr.mxu0 0.0
    %111 = vmatpush2.msra.mxu0 1.0
    %112 = vmatprep.subr.mxu0 0.0
    %113 = vmatpush2.msra.mxu0 1.0
    %114 = vmatprep.subr.mxu0 0.0
    %115 = vmatpush2.msra.mxu0 1.0
    %116 = vmatprep.subr.mxu0 0.0
    %117 = vmatpush2.msra.mxu0 1.0
    %118 = vmatprep.subr.mxu0 0.0
    %119 = vmatpush2.msra.mxu0 1.0
    %120 = vmatprep.subr.mxu0 0.0
    %121 = vmatpush2.msra.mxu0 1.0
    %122 = vmatprep.subr.mxu0 0.0
    %123 = vmatpush2.msra.mxu0 1.0
    %124 = vmatprep.mubr.f32.mxu0 %v53
    %125 = vmatmul.mubr.f32.gmra.mxu0 %v52
    %v126 = vpop.f32.mrf.mxu0
    %v127 = vadd.f32 0.0, %v126
    %v128 = vpop.f32.mrf.mxu0
    %129 = vmatprep.mubr.f32.mxu0 %v55
    %130 = vmatmul.mubr.f32.gmra.mxu0 %v54
    %v131 = vpop.f32.mrf.mxu0
    %v132 = vadd.f32 0.0, %v131
    %v133 = vpop.f32.mrf.mxu0
    %134 = vdwg.mxu0
    %v135 = vmul.f32 %v127, 0.00390625
    %v136 = vmul.f32 %v132, 0.00390625
    %138 = vset.pattern.permute.xlu0 0
    %139 = vperm.xlu0 %138, %v135
    %v140 = vpop.permute.xlu0 %139
    %143 = vset.pattern.permute.xlu0 0
    %144 = vperm.xlu0 %143, %v136
    %v145 = vpop.permute.xlu0 %144
    %v147 = vsub.f32 %v52, %v140
    %v148 = vsub.f32 %v53, %v140
    %v149 = vsub.f32 %v54, %v145
    %v150 = vsub.f32 %v55, %v145
    %v151 = vmul.f32 %v147, %v147
    %v152 = vmul.f32 %v148, %v148
    %v153 = vmul.f32 %v149, %v149
    %v154 = vmul.f32 %v150, %v150
    %155 = vmatprep.subr.mxu0 0.0
    %156 = vmatpush1.msra.mxu0 1.0
    %157 = vmatprep.subr.mxu0 0.0
    %158 = vmatpush1.msra.mxu0 1.0
    %159 = vmatprep.subr.mxu0 0.0
    %160 = vmatpush1.msra.mxu0 1.0
    %161 = vmatprep.subr.mxu0 0.0
    %162 = vmatpush1.msra.mxu0 1.0
    %163 = vmatprep.subr.mxu0 0.0
    %164 = vmatpush1.msra.mxu0 1.0
    %165 = vmatprep.subr.mxu0 0.0
    %166 = vmatpush1.msra.mxu0 1.0
    %167 = vmatprep.subr.mxu0 0.0
    %168 = vmatpush1.msra.mxu0 1.0
    %169 = vmatprep.subr.mxu0 0.0
    %170 = vmatpush1.msra.mxu0 1.0
    %171 = vmatprep.subr.mxu0 0.0
    %172 = vmatpush1.msra.mxu0 1.0
    %173 = vmatprep.subr.mxu0 0.0
    %174 = vmatpush1.msra.mxu0 1.0
    %175 = vmatprep.subr.mxu0 0.0
    %176 = vmatpush1.msra.mxu0 1.0
    %177 = vmatprep.subr.mxu0 0.0
    %178 = vmatpush1.msra.mxu0 1.0
    %179 = vmatprep.subr.mxu0 0.0
    %180 = vmatpush1.msra.mxu0 1.0
    %181 = vmatprep.subr.mxu0 0.0
    %182 = vmatpush1.msra.mxu0 1.0
    %183 = vmatprep.subr.mxu0 0.0
    %184 = vmatpush1.msra.mxu0 1.0
    %185 = vmatprep.subr.mxu0 0.0
    %186 = vmatpush1.msra.mxu0 1.0
    %187 = vmatprep.subr.mxu0 0.0
    %188 = vmatpush2.msra.mxu0 1.0
    %189 = vmatprep.subr.mxu0 0.0
    %190 = vmatpush2.msra.mxu0 1.0
    %191 = vmatprep.subr.mxu0 0.0
    %192 = vmatpush2.msra.mxu0 1.0
    %193 = vmatprep.subr.mxu0 0.0
    %194 = vmatpush2.msra.mxu0 1.0
    %195 = vmatprep.subr.mxu0 0.0
    %196 = vmatpush2.msra.mxu0 1.0
    %197 = vmatprep.subr.mxu0 0.0
    %198 = vmatpush2.msra.mxu0 1.0
    %199 = vmatprep.subr.mxu0 0.0
    %200 = vmatpush2.msra.mxu0 1.0
    %201 = vmatprep.subr.mxu0 0.0
    %202 = vmatpush2.msra.mxu0 1.0
    %203 = vmatprep.subr.mxu0 0.0
    %204 = vmatpush2.msra.mxu0 1.0
    %205 = vmatprep.subr.mxu0 0.0
    %206 = vmatpush2.msra.mxu0 1.0
    %207 = vmatprep.subr.mxu0 0.0
    %208 = vmatpush2.msra.mxu0 1.0
    %209 = vmatprep.subr.mxu0 0.0
    %210 = vmatpush2.msra.mxu0 1.0
    %211 = vmatprep.subr.mxu0 0.0
    %212 = vmatpush2.msra.mxu0 1.0
    %213 = vmatprep.subr.mxu0 0.0
    %214 = vmatpush2.msra.mxu0 1.0
    %215 = vmatprep.subr.mxu0 0.0
    %216 = vmatpush2.msra.mxu0 1.0
    %217 = vmatprep.subr.mxu0 0.0
    %218 = vmatpush2.msra.mxu0 1.0
    %219 = vmatprep.mubr.f32.mxu0 %v152
    %220 = vmatmul.mubr.f32.gmra.mxu0 %v151
    %v221 = vpop.f32.mrf.mxu0
    %v222 = vadd.f32 0.0, %v221
    %v223 = vpop.f32.mrf.mxu0
    %224 = vmatprep.mubr.f32.mxu0 %v154
    %225 = vmatmul.mubr.f32.gmra.mxu0 %v153
    %v226 = vpop.f32.mrf.mxu0
    %v227 = vadd.f32 0.0, %v226
    %v228 = vpop.f32.mrf.mxu0
    %229 = vdwg.mxu0
    %v230 = vmul.f32 %v222, 0.00390625
    %v231 = vmul.f32 %v227, 0.00390625
    %v232 = vadd.f32 %v230, 1e-05
    %v233 = vadd.f32 %v231, 1e-05
    %v234 = vrsqrt.pop %v232
    %v235 = vrsqrt.pop %v233
    %237 = vset.pattern.permute.xlu0 0
    %238 = vperm.xlu0 %237, %v234
    %v239 = vpop.permute.xlu0 %238
    %242 = vset.pattern.permute.xlu0 0
    %243 = vperm.xlu0 %242, %v235
    %v244 = vpop.permute.xlu0 %243
    %v246 = vmul.f32 %v147, %v239
    %v247 = vmul.f32 %v148, %v239
    %v248 = vmul.f32 %v149, %v244
    %v249 = vmul.f32 %v150, %v244
    %251 = vset.pattern.permute.xlu0 0
    %252 = vperm.xlu0 %251, %v56
    %v253 = vpop.permute.xlu0 %252
    %256 = vset.pattern.permute.xlu0 0
    %257 = vperm.xlu0 %256, %v57
    %v258 = vpop.permute.xlu0 %257
    %v260 = vmul.f32 %v246, %v253
    %v261 = vmul.f32 %v247, %v253
    %v262 = vmul.f32 %v248, %v258
    %v263 = vmul.f32 %v249, %v258
    %265 = vset.pattern.permute.xlu0 0
    %266 = vperm.xlu0 %265, %v58
    %v267 = vpop.permute.xlu0 %266
    %270 = vset.pattern.permute.xlu0 0
    %271 = vperm.xlu0 %270, %v59
    %v272 = vpop.permute.xlu0 %271
    %v274 = vadd.f32 %v260, %v267
    %v275 = vadd.f32 %v261, %v267
    %v276 = vadd.f32 %v262, %v272
    %v277 = vadd.f32 %v263, %v272
    %v278 = vmax.f32 %v274, 0.0
    %v279 = vmax.f32 %v275, 0.0
    %v280 = vmax.f32 %v276, 0.0
    %v281 = vmax.f32 %v277, 0.0
    %v282 = vld [vmem:[%s1 + $0x40] sm:$0xff]
    %v283 = vld [vmem:[%s1 + $0x48] sm:$0xff]
    %v284 = vld [vmem:[%s1 + $0x50] sm:$0xff]
    %v285 = vld [vmem:[%s1 + $0x58] sm:$0xff]
    %v286 = vld [vmem:[%s1 + $0x60] sm:$0xff]
    %v287 = vld [vmem:[%s1 + $0x68] sm:$0xff]
    %v288 = vld [vmem:[%s1 + $0x70] sm:$0xff]
    %v289 = vld [vmem:[%s1 + $0x78] sm:$0xff]
    %291 = vset.pattern.permute.xlu0 0
    %292 = vperm.xlu0 %291, %v286
    %v293 = vpop.permute.xlu0 %292
    %296 = vset.pattern.permute.xlu0 0
    %297 = vperm.xlu0 %296, %v287
    %v298 = vpop.permute.xlu0 %297
    %301 = vset.pattern.permute.xlu0 0
    %302 = vperm.xlu0 %301, %v288
    %v303 = vpop.permute.xlu0 %302
    %306 = vset.pattern.permute.xlu0 0
    %307 = vperm.xlu0 %306, %v289
    %v308 = vpop.permute.xlu0 %307
    %vm310 = vcmask 130048
    %v312 = vsel %vm310, %v282, 0
    %v315 = vsel %vm310, %v283, 0
    %v318 = vsel %vm310, %v284, 0
    %v321 = vsel %vm310, %v285, 0
    %323 = vmatprep.subr.mxu0 0.0
    %324 = vmatpush1.msra.mxu0 0.0
    %325 = vmatprep.subr.mxu0 0.0
    %326 = vmatpush1.msra.mxu0 0.0
    %327 = vmatprep.subr.mxu0 0.0
    %328 = vmatpush1.msra.mxu0 0.0
    %329 = vmatprep.subr.mxu0 0.0
    %330 = vmatpush1.msra.mxu0 0.0
    %331 = vmatprep.subr.mxu0 0.0
    %332 = vmatpush1.msra.mxu0 0.0
    %333 = vmatprep.subr.mxu0 0.0
    %334 = vmatpush1.msra.mxu0 0.0
    %335 = vmatprep.subr.mxu0 0.0
    %336 = vmatpush1.msra.mxu0 0.0
    %337 = vmatprep.subr.mxu0 0.0
    %338 = vmatpush1.msra.mxu0 0.0
    %339 = vmatprep.subr.mxu0 0.0
    %340 = vmatpush1.msra.mxu0 0.0
    %341 = vmatprep.subr.mxu0 0.0
    %342 = vmatpush1.msra.mxu0 0.0
    %343 = vmatprep.subr.mxu0 0.0
    %344 = vmatpush1.msra.mxu0 0.0
    %345 = vmatprep.subr.mxu0 0.0
    %346 = vmatpush1.msra.mxu0 0.0
    %347 = vmatprep.subr.mxu0 0.0
    %348 = vmatpush1.msra.mxu0 0.0
    %349 = vmatprep.subr.mxu0 0.0
    %350 = vmatpush1.msra.mxu0 0.0
    %351 = vmatprep.subr.mxu0 %v281
    %352 = vmatpush1.msra.mxu0 %v280
    %353 = vmatprep.subr.mxu0 %v279
    %354 = vmatpush1.msra.mxu0 %v278
    %355 = vmatprep.subr.mxu0 0.0
    %356 = vmatpush2.msra.mxu0 0.0
    %357 = vmatprep.subr.mxu0 0.0
    %358 = vmatpush2.msra.mxu0 0.0
    %359 = vmatprep.subr.mxu0 0.0
    %360 = vmatpush2.msra.mxu0 0.0
    %361 = vmatprep.subr.mxu0 0.0
    %362 = vmatpush2.msra.mxu0 0.0
    %363 = vmatprep.subr.mxu0 0.0
    %364 = vmatpush2.msra.mxu0 0.0
    %365 = vmatprep.subr.mxu0 0.0
    %366 = vmatpush2.msra.mxu0 0.0
    %367 = vmatprep.subr.mxu0 0.0
    %368 = vmatpush2.msra.mxu0 0.0
    %369 = vmatprep.subr.mxu0 0.0
    %370 = vmatpush2.msra.mxu0 0.0
    %371 = vmatprep.subr.mxu0 0.0
    %372 = vmatpush2.msra.mxu0 0.0
    %373 = vmatprep.subr.mxu0 0.0
    %374 = vmatpush2.msra.mxu0 0.0
    %375 = vmatprep.subr.mxu0 0.0
    %376 = vmatpush2.msra.mxu0 0.0
    %377 = vmatprep.subr.mxu0 0.0
    %378 = vmatpush2.msra.mxu0 0.0
    %379 = vmatprep.subr.mxu0 0.0
    %380 = vmatpush2.msra.mxu0 0.0
    %381 = vmatprep.subr.mxu0 0.0
    %382 = vmatpush2.msra.mxu0 0.0
    %383 = vmatprep.subr.mxu0 0.0
    %384 = vmatpush2.msra.mxu0 0.0
    %385 = vmatprep.subr.mxu0 0.0
    %386 = vmatpush2.msra.mxu0 0.0
    %387 = vmatprep.mubr.f32.mxu0 0.0
    %388 = vmatmul.mubr.f32.gmra.mxu0 %v312
    %v389 = vpop.f32.mrf.mxu0
    %v390 = vadd.f32 %v293, %v389
    %v391 = vpop.f32.mrf.mxu0
    %v392 = vadd.f32 %v293, %v391
    %393 = vmatprep.mubr.f32.mxu0 0.0
    %394 = vmatmul.mubr.f32.gmra.mxu0 %v315
    %v395 = vpop.f32.mrf.mxu0
    %v396 = vadd.f32 %v298, %v395
    %v397 = vpop.f32.mrf.mxu0
    %v398 = vadd.f32 %v298, %v397
    %399 = vmatprep.mubr.f32.mxu0 0.0
    %400 = vmatmul.mubr.f32.gmra.mxu0 %v318
    %v401 = vpop.f32.mrf.mxu0
    %v402 = vadd.f32 %v303, %v401
    %v403 = vpop.f32.mrf.mxu0
    %v404 = vadd.f32 %v303, %v403
    %405 = vmatprep.mubr.f32.mxu0 0.0
    %406 = vmatmul.mubr.f32.gmra.mxu0 %v321
    %v407 = vpop.f32.mrf.mxu0
    %v408 = vadd.f32 %v308, %v407
    %v409 = vpop.f32.mrf.mxu0
    %v410 = vadd.f32 %v308, %v409
    %411 = vdwg.mxu0
    %v412 = vld [vmem:[%s1 + $0x80] sm:$0xff]
    %v413 = vld [vmem:[%s1 + $0x88] sm:$0xff]
    %v414 = vld [vmem:[%s1 + $0x90] sm:$0xff]
    %v415 = vld [vmem:[%s1 + $0x98] sm:$0xff]
    %v416 = vld [vmem:[%s1 + $0xa0] sm:$0xff]
    %v417 = vld [vmem:[%s1 + $0xa8] sm:$0xff]
    %v418 = vld [vmem:[%s1 + $0xb0] sm:$0xff]
    %v419 = vld [vmem:[%s1 + $0xb8] sm:$0xff]
    %420 = vmatprep.subr.mxu0 0.0
    %421 = vmatpush1.msra.mxu0 1.0
    %422 = vmatprep.subr.mxu0 0.0
    %423 = vmatpush1.msra.mxu0 1.0
    %424 = vmatprep.subr.mxu0 0.0
    %425 = vmatpush1.msra.mxu0 1.0
    %426 = vmatprep.subr.mxu0 0.0
    %427 = vmatpush1.msra.mxu0 1.0
    %428 = vmatprep.subr.mxu0 0.0
    %429 = vmatpush1.msra.mxu0 1.0
    %430 = vmatprep.subr.mxu0 0.0
    %431 = vmatpush1.msra.mxu0 1.0
    %432 = vmatprep.subr.mxu0 0.0
    %433 = vmatpush1.msra.mxu0 1.0
    %434 = vmatprep.subr.mxu0 0.0
    %435 = vmatpush1.msra.mxu0 1.0
    %436 = vmatprep.subr.mxu0 0.0
    %437 = vmatpush1.msra.mxu0 1.0
    %438 = vmatprep.subr.mxu0 0.0
    %439 = vmatpush1.msra.mxu0 1.0
    %440 = vmatprep.subr.mxu0 0.0
    %441 = vmatpush1.msra.mxu0 1.0
    %442 = vmatprep.subr.mxu0 0.0
    %443 = vmatpush1.msra.mxu0 1.0
    %444 = vmatprep.subr.mxu0 0.0
    %445 = vmatpush1.msra.mxu0 1.0
    %446 = vmatprep.subr.mxu0 0.0
    %447 = vmatpush1.msra.mxu0 1.0
    %448 = vmatprep.subr.mxu0 0.0
    %449 = vmatpush1.msra.mxu0 1.0
    %450 = vmatprep.subr.mxu0 0.0
    %451 = vmatpush1.msra.mxu0 1.0
    %452 = vmatprep.subr.mxu0 0.0
    %453 = vmatpush2.msra.mxu0 1.0
    %454 = vmatprep.subr.mxu0 0.0
    %455 = vmatpush2.msra.mxu0 1.0
    %456 = vmatprep.subr.mxu0 0.0
    %457 = vmatpush2.msra.mxu0 1.0
    %458 = vmatprep.subr.mxu0 0.0
    %459 = vmatpush2.msra.mxu0 1.0
    %460 = vmatprep.subr.mxu0 0.0
    %461 = vmatpush2.msra.mxu0 1.0
    %462 = vmatprep.subr.mxu0 0.0
    %463 = vmatpush2.msra.mxu0 1.0
    %464 = vmatprep.subr.mxu0 0.0
    %465 = vmatpush2.msra.mxu0 1.0
    %466 = vmatprep.subr.mxu0 0.0
    %467 = vmatpush2.msra.mxu0 1.0
    %468 = vmatprep.subr.mxu0 0.0
    %469 = vmatpush2.msra.mxu0 1.0
    %470 = vmatprep.subr.mxu0 0.0
    %471 = vmatpush2.msra.mxu0 1.0
    %472 = vmatprep.subr.mxu0 0.0
    %473 = vmatpush2.msra.mxu0 1.0
    %474 = vmatprep.subr.mxu0 0.0
    %475 = vmatpush2.msra.mxu0 1.0
    %476 = vmatprep.subr.mxu0 0.0
    %477 = vmatpush2.msra.mxu0 1.0
    %478 = vmatprep.subr.mxu0 0.0
    %479 = vmatpush2.msra.mxu0 1.0
    %480 = vmatprep.subr.mxu0 0.0
    %481 = vmatpush2.msra.mxu0 1.0
    %482 = vmatprep.subr.mxu0 0.0
    %483 = vmatpush2.msra.mxu0 1.0
    %484 = vmatprep.mubr.f32.mxu0 %v392
    %485 = vmatmul.mubr.f32.gmra.mxu0 %v390
    %v486 = vpop.f32.mrf.mxu0
    %v487 = vadd.f32 0.0, %v486
    %v488 = vpop.f32.mrf.mxu0
    %489 = vmatprep.mubr.f32.mxu0 %v398
    %490 = vmatmul.mubr.f32.gmra.mxu0 %v396
    %v491 = vpop.f32.mrf.mxu0
    %v492 = vadd.f32 0.0, %v491
    %v493 = vpop.f32.mrf.mxu0
    %494 = vmatprep.mubr.f32.mxu0 %v404
    %495 = vmatmul.mubr.f32.gmra.mxu0 %v402
    %v496 = vpop.f32.mrf.mxu0
    %v497 = vadd.f32 0.0, %v496
    %v498 = vpop.f32.mrf.mxu0
    %499 = vmatprep.mubr.f32.mxu0 %v410
    %500 = vmatmul.mubr.f32.gmra.mxu0 %v408
    %v501 = vpop.f32.mrf.mxu0
    %v502 = vadd.f32 0.0, %v501
    %v503 = vpop.f32.mrf.mxu0
    %504 = vdwg.mxu0
    %v505 = vmul.f32 %v487, 0.00390625
    %v506 = vmul.f32 %v492, 0.00390625
    %v507 = vmul.f32 %v497, 0.00390625
    %v508 = vmul.f32 %v502, 0.00390625
    %510 = vset.pattern.permute.xlu0 0
    %511 = vperm.xlu0 %510, %v505
    %v512 = vpop.permute.xlu0 %511
    %515 = vset.pattern.permute.xlu0 0
    %516 = vperm.xlu0 %515, %v506
    %v517 = vpop.permute.xlu0 %516
    %520 = vset.pattern.permute.xlu0 0
    %521 = vperm.xlu0 %520, %v507
    %v522 = vpop.permute.xlu0 %521
    %525 = vset.pattern.permute.xlu0 0
    %526 = vperm.xlu0 %525, %v508
    %v527 = vpop.permute.xlu0 %526
    %v529 = vsub.f32 %v390, %v512
    %v530 = vsub.f32 %v392, %v512
    %v531 = vsub.f32 %v396, %v517
    %v532 = vsub.f32 %v398, %v517
    %v533 = vsub.f32 %v402, %v522
    %v534 = vsub.f32 %v404, %v522
    %v535 = vsub.f32 %v408, %v527
    %v536 = vsub.f32 %v410, %v527
    %v537 = vmul.f32 %v529, %v529
    %v538 = vmul.f32 %v530, %v530
    %v539 = vmul.f32 %v531, %v531
    %v540 = vmul.f32 %v532, %v532
    %v541 = vmul.f32 %v533, %v533
    %v542 = vmul.f32 %v534, %v534
    %v543 = vmul.f32 %v535, %v535
    %v544 = vmul.f32 %v536, %v536
    %545 = vmatprep.subr.mxu0 0.0
    %546 = vmatpush1.msra.mxu0 1.0
    %547 = vmatprep.subr.mxu0 0.0
    %548 = vmatpush1.msra.mxu0 1.0
    %549 = vmatprep.subr.mxu0 0.0
    %550 = vmatpush1.msra.mxu0 1.0
    %551 = vmatprep.subr.mxu0 0.0
    %552 = vmatpush1.msra.mxu0 1.0
    %553 = vmatprep.subr.mxu0 0.0
    %554 = vmatpush1.msra.mxu0 1.0
    %555 = vmatprep.subr.mxu0 0.0
    %556 = vmatpush1.msra.mxu0 1.0
    %557 = vmatprep.subr.mxu0 0.0
    %558 = vmatpush1.msra.mxu0 1.0
    %559 = vmatprep.subr.mxu0 0.0
    %560 = vmatpush1.msra.mxu0 1.0
    %561 = vmatprep.subr.mxu0 0.0
    %562 = vmatpush1.msra.mxu0 1.0
    %563 = vmatprep.subr.mxu0 0.0
    %564 = vmatpush1.msra.mxu0 1.0
    %565 = vmatprep.subr.mxu0 0.0
    %566 = vmatpush1.msra.mxu0 1.0
    %567 = vmatprep.subr.mxu0 0.0
    %568 = vmatpush1.msra.mxu0 1.0
    %569 = vmatprep.subr.mxu0 0.0
    %570 = vmatpush1.msra.mxu0 1.0
    %571 = vmatprep.subr.mxu0 0.0
    %572 = vmatpush1.msra.mxu0 1.0
    %573 = vmatprep.subr.mxu0 0.0
    %574 = vmatpush1.msra.mxu0 1.0
    %575 = vmatprep.subr.mxu0 0.0
    %576 = vmatpush1.msra.mxu0 1.0
    %577 = vmatprep.subr.mxu0 0.0
    %578 = vmatpush2.msra.mxu0 1.0
    %579 = vmatprep.subr.mxu0 0.0
    %580 = vmatpush2.msra.mxu0 1.0
    %581 = vmatprep.subr.mxu0 0.0
    %582 = vmatpush2.msra.mxu0 1.0
    %583 = vmatprep.subr.mxu0 0.0
    %584 = vmatpush2.msra.mxu0 1.0
    %585 = vmatprep.subr.mxu0 0.0
    %586 = vmatpush2.msra.mxu0 1.0
    %587 = vmatprep.subr.mxu0 0.0
    %588 = vmatpush2.msra.mxu0 1.0
    %589 = vmatprep.subr.mxu0 0.0
    %590 = vmatpush2.msra.mxu0 1.0
    %591 = vmatprep.subr.mxu0 0.0
    %592 = vmatpush2.msra.mxu0 1.0
    %593 = vmatprep.subr.mxu0 0.0
    %594 = vmatpush2.msra.mxu0 1.0
    %595 = vmatprep.subr.mxu0 0.0
    %596 = vmatpush2.msra.mxu0 1.0
    %597 = vmatprep.subr.mxu0 0.0
    %598 = vmatpush2.msra.mxu0 1.0
    %599 = vmatprep.subr.mxu0 0.0
    %600 = vmatpush2.msra.mxu0 1.0
    %601 = vmatprep.subr.mxu0 0.0
    %602 = vmatpush2.msra.mxu0 1.0
    %603 = vmatprep.subr.mxu0 0.0
    %604 = vmatpush2.msra.mxu0 1.0
    %605 = vmatprep.subr.mxu0 0.0
    %606 = vmatpush2.msra.mxu0 1.0
    %607 = vmatprep.subr.mxu0 0.0
    %608 = vmatpush2.msra.mxu0 1.0
    %609 = vmatprep.mubr.f32.mxu0 %v538
    %610 = vmatmul.mubr.f32.gmra.mxu0 %v537
    %v611 = vpop.f32.mrf.mxu0
    %v612 = vadd.f32 0.0, %v611
    %v613 = vpop.f32.mrf.mxu0
    %614 = vmatprep.mubr.f32.mxu0 %v540
    %615 = vmatmul.mubr.f32.gmra.mxu0 %v539
    %v616 = vpop.f32.mrf.mxu0
    %v617 = vadd.f32 0.0, %v616
    %v618 = vpop.f32.mrf.mxu0
    %619 = vmatprep.mubr.f32.mxu0 %v542
    %620 = vmatmul.mubr.f32.gmra.mxu0 %v541
    %v621 = vpop.f32.mrf.mxu0
    %v622 = vadd.f32 0.0, %v621
    %v623 = vpop.f32.mrf.mxu0
    %624 = vmatprep.mubr.f32.mxu0 %v544
    %625 = vmatmul.mubr.f32.gmra.mxu0 %v543
    %v626 = vpop.f32.mrf.mxu0
    %v627 = vadd.f32 0.0, %v626
    %v628 = vpop.f32.mrf.mxu0
    %629 = vdwg.mxu0
    %v630 = vmul.f32 %v612, 0.00390625
    %v631 = vmul.f32 %v617, 0.00390625
    %v632 = vmul.f32 %v622, 0.00390625
    %v633 = vmul.f32 %v627, 0.00390625
    %v634 = vadd.f32 %v630, 1e-05
    %v635 = vadd.f32 %v631, 1e-05
    %v636 = vadd.f32 %v632, 1e-05
    %v637 = vadd.f32 %v633, 1e-05
    %v638 = vrsqrt.pop %v634
    %v639 = vrsqrt.pop %v635
    %v640 = vrsqrt.pop %v636
    %v641 = vrsqrt.pop %v637
    %643 = vset.pattern.permute.xlu0 0
    %644 = vperm.xlu0 %643, %v638
    %v645 = vpop.permute.xlu0 %644
    %648 = vset.pattern.permute.xlu0 0
    %649 = vperm.xlu0 %648, %v639
    %v650 = vpop.permute.xlu0 %649
    %653 = vset.pattern.permute.xlu0 0
    %654 = vperm.xlu0 %653, %v640
    %v655 = vpop.permute.xlu0 %654
    %658 = vset.pattern.permute.xlu0 0
    %659 = vperm.xlu0 %658, %v641
    %v660 = vpop.permute.xlu0 %659
    %v662 = vmul.f32 %v529, %v645
    %v663 = vmul.f32 %v530, %v645
    %v664 = vmul.f32 %v531, %v650
    %v665 = vmul.f32 %v532, %v650
    %v666 = vmul.f32 %v533, %v655
    %v667 = vmul.f32 %v534, %v655
    %v668 = vmul.f32 %v535, %v660
    %v669 = vmul.f32 %v536, %v660
    %671 = vset.pattern.permute.xlu0 0
    %672 = vperm.xlu0 %671, %v412
    %v673 = vpop.permute.xlu0 %672
    %676 = vset.pattern.permute.xlu0 0
    %677 = vperm.xlu0 %676, %v413
    %v678 = vpop.permute.xlu0 %677
    %681 = vset.pattern.permute.xlu0 0
    %682 = vperm.xlu0 %681, %v414
    %v683 = vpop.permute.xlu0 %682
    %686 = vset.pattern.permute.xlu0 0
    %687 = vperm.xlu0 %686, %v415
    %v688 = vpop.permute.xlu0 %687
    %v690 = vmul.f32 %v662, %v673
    %v691 = vmul.f32 %v663, %v673
    %v692 = vmul.f32 %v664, %v678
    %v693 = vmul.f32 %v665, %v678
    %v694 = vmul.f32 %v666, %v683
    %v695 = vmul.f32 %v667, %v683
    %v696 = vmul.f32 %v668, %v688
    %v697 = vmul.f32 %v669, %v688
    %699 = vset.pattern.permute.xlu0 0
    %700 = vperm.xlu0 %699, %v416
    %v701 = vpop.permute.xlu0 %700
    %704 = vset.pattern.permute.xlu0 0
    %705 = vperm.xlu0 %704, %v417
    %v706 = vpop.permute.xlu0 %705
    %709 = vset.pattern.permute.xlu0 0
    %710 = vperm.xlu0 %709, %v418
    %v711 = vpop.permute.xlu0 %710
    %714 = vset.pattern.permute.xlu0 0
    %715 = vperm.xlu0 %714, %v419
    %v716 = vpop.permute.xlu0 %715
    %v718 = vadd.f32 %v690, %v701
    %v719 = vadd.f32 %v691, %v701
    %v720 = vadd.f32 %v692, %v706
    %v721 = vadd.f32 %v693, %v706
    %v722 = vadd.f32 %v694, %v711
    %v723 = vadd.f32 %v695, %v711
    %v724 = vadd.f32 %v696, %v716
    %v725 = vadd.f32 %v697, %v716
    %v726 = vmax.f32 %v718, 0.0
    %v727 = vmax.f32 %v719, 0.0
    %v728 = vmax.f32 %v720, 0.0
    %v729 = vmax.f32 %v721, 0.0
    %v730 = vmax.f32 %v722, 0.0
    %v731 = vmax.f32 %v723, 0.0
    %v732 = vmax.f32 %v724, 0.0
    %v733 = vmax.f32 %v725, 0.0
    %v734 = vld [vmem:[%s1 + $0xc0] sm:$0xff]
    %v735 = vld [vmem:[%s1 + $0xc8] sm:$0xff]
    %v736 = vld [vmem:[%s1 + $0xd0] sm:$0xff]
    %v737 = vld [vmem:[%s1 + $0xd8] sm:$0xff]
    %739 = vset.pattern.permute.xlu0 0
    %740 = vperm.xlu0 %739, %v736
    %v741 = vpop.permute.xlu0 %740
    %744 = vset.pattern.permute.xlu0 0
    %745 = vperm.xlu0 %744, %v737
    %v746 = vpop.permute.xlu0 %745
    %vm748 = vcmask 261120
    %v750 = vsel %vm748, %v734, 0
    %v753 = vsel %vm748, %v735, 0
    %755 = vmatprep.subr.mxu0 0.0
    %756 = vmatpush1.msra.mxu0 0.0
    %757 = vmatprep.subr.mxu0 0.0
    %758 = vmatpush1.msra.mxu0 0.0
    %759 = vmatprep.subr.mxu0 0.0
    %760 = vmatpush1.msra.mxu0 0.0
    %761 = vmatprep.subr.mxu0 0.0
    %762 = vmatpush1.msra.mxu0 0.0
    %763 = vmatprep.subr.mxu0 0.0
    %764 = vmatpush1.msra.mxu0 0.0
    %765 = vmatprep.subr.mxu0 0.0
    %766 = vmatpush1.msra.mxu0 0.0
    %767 = vmatprep.subr.mxu0 0.0
    %768 = vmatpush1.msra.mxu0 0.0
    %769 = vmatprep.subr.mxu0 0.0
    %770 = vmatpush1.msra.mxu0 0.0
    %771 = vmatprep.subr.mxu0 0.0
    %772 = vmatpush1.msra.mxu0 0.0
    %773 = vmatprep.subr.mxu0 0.0
    %774 = vmatpush1.msra.mxu0 0.0
    %775 = vmatprep.subr.mxu0 0.0
    %776 = vmatpush1.msra.mxu0 0.0
    %777 = vmatprep.subr.mxu0 0.0
    %778 = vmatpush1.msra.mxu0 0.0
    %779 = vmatprep.subr.mxu0 %v733
    %780 = vmatpush1.msra.mxu0 %v732
    %781 = vmatprep.subr.mxu0 %v731
    %782 = vmatpush1.msra.mxu0 %v730
    %783 = vmatprep.subr.mxu0 %v729
    %784 = vmatpush1.msra.mxu0 %v728
    %785 = vmatprep.subr.mxu0 %v727
    %786 = vmatpush1.msra.mxu0 %v726
    %787 = vmatprep.subr.mxu0 0.0
    %788 = vmatpush2.msra.mxu0 0.0
    %789 = vmatprep.subr.mxu0 0.0
    %790 = vmatpush2.msra.mxu0 0.0
    %791 = vmatprep.subr.mxu0 0.0
    %792 = vmatpush2.msra.mxu0 0.0
    %793 = vmatprep.subr.mxu0 0.0
    %794 = vmatpush2.msra.mxu0 0.0
    %795 = vmatprep.subr.mxu0 0.0
    %796 = vmatpush2.msra.mxu0 0.0
    %797 = vmatprep.subr.mxu0 0.0
    %798 = vmatpush2.msra.mxu0 0.0
    %799 = vmatprep.subr.mxu0 0.0
    %800 = vmatpush2.msra.mxu0 0.0
    %801 = vmatprep.subr.mxu0 0.0
    %802 = vmatpush2.msra.mxu0 0.0
    %803 = vmatprep.subr.mxu0 0.0
    %804 = vmatpush2.msra.mxu0 0.0
    %805 = vmatprep.subr.mxu0 0.0
    %806 = vmatpush2.msra.mxu0 0.0
    %807 = vmatprep.subr.mxu0 0.0
    %808 = vmatpush2.msra.mxu0 0.0
    %809 = vmatprep.subr.mxu0 0.0
    %810 = vmatpush2.msra.mxu0 0.0
    %811 = vmatprep.subr.mxu0 0.0
    %812 = vmatpush2.msra.mxu0 0.0
    %813 = vmatprep.subr.mxu0 0.0
    %814 = vmatpush2.msra.mxu0 0.0
    %815 = vmatprep.subr.mxu0 0.0
    %816 = vmatpush2.msra.mxu0 0.0
    %817 = vmatprep.subr.mxu0 0.0
    %818 = vmatpush2.msra.mxu0 0.0
    %819 = vmatprep.mubr.f32.mxu0 0.0
    %820 = vmatmul.mubr.f32.gmra.mxu0 %v750
    %v821 = vpop.f32.mrf.mxu0
    %v822 = vadd.f32 %v741, %v821
    %v823 = vpop.f32.mrf.mxu0
    %v824 = vadd.f32 %v741, %v823
    %825 = vmatprep.mubr.f32.mxu0 0.0
    %826 = vmatmul.mubr.f32.gmra.mxu0 %v753
    %v827 = vpop.f32.mrf.mxu0
    %v828 = vadd.f32 %v746, %v827
    %v829 = vpop.f32.mrf.mxu0
    %v830 = vadd.f32 %v746, %v829
    %831 = vdwg.mxu0
    %v832 = vld [vmem:[%s1 + $0xe0] sm:$0xff]
    %v833 = vld [vmem:[%s1 + $0xe8] sm:$0xff]
    %v834 = vld [vmem:[%s1 + $0xf0] sm:$0xff]
    %v835 = vld [vmem:[%s1 + $0xf8] sm:$0xff]
    %836 = vmatprep.subr.mxu0 0.0
    %837 = vmatpush1.msra.mxu0 1.0
    %838 = vmatprep.subr.mxu0 0.0
    %839 = vmatpush1.msra.mxu0 1.0
    %840 = vmatprep.subr.mxu0 0.0
    %841 = vmatpush1.msra.mxu0 1.0
    %842 = vmatprep.subr.mxu0 0.0
    %843 = vmatpush1.msra.mxu0 1.0
    %844 = vmatprep.subr.mxu0 0.0
    %845 = vmatpush1.msra.mxu0 1.0
    %846 = vmatprep.subr.mxu0 0.0
    %847 = vmatpush1.msra.mxu0 1.0
    %848 = vmatprep.subr.mxu0 0.0
    %849 = vmatpush1.msra.mxu0 1.0
    %850 = vmatprep.subr.mxu0 0.0
    %851 = vmatpush1.msra.mxu0 1.0
    %852 = vmatprep.subr.mxu0 0.0
    %853 = vmatpush1.msra.mxu0 1.0
    %854 = vmatprep.subr.mxu0 0.0
    %855 = vmatpush1.msra.mxu0 1.0
    %856 = vmatprep.subr.mxu0 0.0
    %857 = vmatpush1.msra.mxu0 1.0
    %858 = vmatprep.subr.mxu0 0.0
    %859 = vmatpush1.msra.mxu0 1.0
    %860 = vmatprep.subr.mxu0 0.0
    %861 = vmatpush1.msra.mxu0 1.0
    %862 = vmatprep.subr.mxu0 0.0
    %863 = vmatpush1.msra.mxu0 1.0
    %864 = vmatprep.subr.mxu0 0.0
    %865 = vmatpush1.msra.mxu0 1.0
    %866 = vmatprep.subr.mxu0 0.0
    %867 = vmatpush1.msra.mxu0 1.0
    %868 = vmatprep.subr.mxu0 0.0
    %869 = vmatpush2.msra.mxu0 1.0
    %870 = vmatprep.subr.mxu0 0.0
    %871 = vmatpush2.msra.mxu0 1.0
    %872 = vmatprep.subr.mxu0 0.0
    %873 = vmatpush2.msra.mxu0 1.0
    %874 = vmatprep.subr.mxu0 0.0
    %875 = vmatpush2.msra.mxu0 1.0
    %876 = vmatprep.subr.mxu0 0.0
    %877 = vmatpush2.msra.mxu0 1.0
    %878 = vmatprep.subr.mxu0 0.0
    %879 = vmatpush2.msra.mxu0 1.0
    %880 = vmatprep.subr.mxu0 0.0
    %881 = vmatpush2.msra.mxu0 1.0
    %882 = vmatprep.subr.mxu0 0.0
    %883 = vmatpush2.msra.mxu0 1.0
    %884 = vmatprep.subr.mxu0 0.0
    %885 = vmatpush2.msra.mxu0 1.0
    %886 = vmatprep.subr.mxu0 0.0
    %887 = vmatpush2.msra.mxu0 1.0
    %888 = vmatprep.subr.mxu0 0.0
    %889 = vmatpush2.msra.mxu0 1.0
    %890 = vmatprep.subr.mxu0 0.0
    %891 = vmatpush2.msra.mxu0 1.0
    %892 = vmatprep.subr.mxu0 0.0
    %893 = vmatpush2.msra.mxu0 1.0
    %894 = vmatprep.subr.mxu0 0.0
    %895 = vmatpush2.msra.mxu0 1.0
    %896 = vmatprep.subr.mxu0 0.0
    %897 = vmatpush2.msra.mxu0 1.0
    %898 = vmatprep.subr.mxu0 0.0
    %899 = vmatpush2.msra.mxu0 1.0
    %900 = vmatprep.mubr.f32.mxu0 %v824
    %901 = vmatmul.mubr.f32.gmra.mxu0 %v822
    %v902 = vpop.f32.mrf.mxu0
    %v903 = vadd.f32 0.0, %v902
    %v904 = vpop.f32.mrf.mxu0
    %905 = vmatprep.mubr.f32.mxu0 %v830
    %906 = vmatmul.mubr.f32.gmra.mxu0 %v828
    %v907 = vpop.f32.mrf.mxu0
    %v908 = vadd.f32 0.0, %v907
    %v909 = vpop.f32.mrf.mxu0
    %910 = vdwg.mxu0
    %v911 = vmul.f32 %v903, 0.00390625
    %v912 = vmul.f32 %v908, 0.00390625
    %914 = vset.pattern.permute.xlu0 0
    %915 = vperm.xlu0 %914, %v911
    %v916 = vpop.permute.xlu0 %915
    %919 = vset.pattern.permute.xlu0 0
    %920 = vperm.xlu0 %919, %v912
    %v921 = vpop.permute.xlu0 %920
    %v923 = vsub.f32 %v822, %v916
    %v924 = vsub.f32 %v824, %v916
    %v925 = vsub.f32 %v828, %v921
    %v926 = vsub.f32 %v830, %v921
    %v927 = vmul.f32 %v923, %v923
    %v928 = vmul.f32 %v924, %v924
    %v929 = vmul.f32 %v925, %v925
    %v930 = vmul.f32 %v926, %v926
    %931 = vmatprep.subr.mxu0 0.0
    %932 = vmatpush1.msra.mxu0 1.0
    %933 = vmatprep.subr.mxu0 0.0
    %934 = vmatpush1.msra.mxu0 1.0
    %935 = vmatprep.subr.mxu0 0.0
    %936 = vmatpush1.msra.mxu0 1.0
    %937 = vmatprep.subr.mxu0 0.0
    %938 = vmatpush1.msra.mxu0 1.0
    %939 = vmatprep.subr.mxu0 0.0
    %940 = vmatpush1.msra.mxu0 1.0
    %941 = vmatprep.subr.mxu0 0.0
    %942 = vmatpush1.msra.mxu0 1.0
    %943 = vmatprep.subr.mxu0 0.0
    %944 = vmatpush1.msra.mxu0 1.0
    %945 = vmatprep.subr.mxu0 0.0
    %946 = vmatpush1.msra.mxu0 1.0
    %947 = vmatprep.subr.mxu0 0.0
    %948 = vmatpush1.msra.mxu0 1.0
    %949 = vmatprep.subr.mxu0 0.0
    %950 = vmatpush1.msra.mxu0 1.0
    %951 = vmatprep.subr.mxu0 0.0
    %952 = vmatpush1.msra.mxu0 1.0
    %953 = vmatprep.subr.mxu0 0.0
    %954 = vmatpush1.msra.mxu0 1.0
    %955 = vmatprep.subr.mxu0 0.0
    %956 = vmatpush1.msra.mxu0 1.0
    %957 = vmatprep.subr.mxu0 0.0
    %958 = vmatpush1.msra.mxu0 1.0
    %959 = vmatprep.subr.mxu0 0.0
    %960 = vmatpush1.msra.mxu0 1.0
    %961 = vmatprep.subr.mxu0 0.0
    %962 = vmatpush1.msra.mxu0 1.0
    %963 = vmatprep.subr.mxu0 0.0
    %964 = vmatpush2.msra.mxu0 1.0
    %965 = vmatprep.subr.mxu0 0.0
    %966 = vmatpush2.msra.mxu0 1.0
    %967 = vmatprep.subr.mxu0 0.0
    %968 = vmatpush2.msra.mxu0 1.0
    %969 = vmatprep.subr.mxu0 0.0
    %970 = vmatpush2.msra.mxu0 1.0
    %971 = vmatprep.subr.mxu0 0.0
    %972 = vmatpush2.msra.mxu0 1.0
    %973 = vmatprep.subr.mxu0 0.0
    %974 = vmatpush2.msra.mxu0 1.0
    %975 = vmatprep.subr.mxu0 0.0
    %976 = vmatpush2.msra.mxu0 1.0
    %977 = vmatprep.subr.mxu0 0.0
    %978 = vmatpush2.msra.mxu0 1.0
    %979 = vmatprep.subr.mxu0 0.0
    %980 = vmatpush2.msra.mxu0 1.0
    %981 = vmatprep.subr.mxu0 0.0
    %982 = vmatpush2.msra.mxu0 1.0
    %983 = vmatprep.subr.mxu0 0.0
    %984 = vmatpush2.msra.mxu0 1.0
    %985 = vmatprep.subr.mxu0 0.0
    %986 = vmatpush2.msra.mxu0 1.0
    %987 = vmatprep.subr.mxu0 0.0
    %988 = vmatpush2.msra.mxu0 1.0
    %989 = vmatprep.subr.mxu0 0.0
    %990 = vmatpush2.msra.mxu0 1.0
    %991 = vmatprep.subr.mxu0 0.0
    %992 = vmatpush2.msra.mxu0 1.0
    %993 = vmatprep.subr.mxu0 0.0
    %994 = vmatpush2.msra.mxu0 1.0
    %995 = vmatprep.mubr.f32.mxu0 %v928
    %996 = vmatmul.mubr.f32.gmra.mxu0 %v927
    %v997 = vpop.f32.mrf.mxu0
    %v998 = vadd.f32 0.0, %v997
    %v999 = vpop.f32.mrf.mxu0
    %1000 = vmatprep.mubr.f32.mxu0 %v930
    %1001 = vmatmul.mubr.f32.gmra.mxu0 %v929
    %v1002 = vpop.f32.mrf.mxu0
    %v1003 = vadd.f32 0.0, %v1002
    %v1004 = vpop.f32.mrf.mxu0
    %1005 = vdwg.mxu0
    %v1006 = vmul.f32 %v998, 0.00390625
    %v1007 = vmul.f32 %v1003, 0.00390625
    %v1008 = vadd.f32 %v1006, 1e-05
    %v1009 = vadd.f32 %v1007, 1e-05
    %v1010 = vrsqrt.pop %v1008
    %v1011 = vrsqrt.pop %v1009
    %1013 = vset.pattern.permute.xlu0 0
    %1014 = vperm.xlu0 %1013, %v1010
    %v1015 = vpop.permute.xlu0 %1014
    %1018 = vset.pattern.permute.xlu0 0
    %1019 = vperm.xlu0 %1018, %v1011
    %v1020 = vpop.permute.xlu0 %1019
    %v1022 = vmul.f32 %v923, %v1015
    %v1023 = vmul.f32 %v924, %v1015
    %v1024 = vmul.f32 %v925, %v1020
    %v1025 = vmul.f32 %v926, %v1020
    %1027 = vset.pattern.permute.xlu0 0
    %1028 = vperm.xlu0 %1027, %v832
    %v1029 = vpop.permute.xlu0 %1028
    %1032 = vset.pattern.permute.xlu0 0
    %1033 = vperm.xlu0 %1032, %v833
    %v1034 = vpop.permute.xlu0 %1033
    %v1036 = vmul.f32 %v1022, %v1029
    %v1037 = vmul.f32 %v1023, %v1029
    %v1038 = vmul.f32 %v1024, %v1034
    %v1039 = vmul.f32 %v1025, %v1034
    %1041 = vset.pattern.permute.xlu0 0
    %1042 = vperm.xlu0 %1041, %v834
    %v1043 = vpop.permute.xlu0 %1042
    %1046 = vset.pattern.permute.xlu0 0
    %1047 = vperm.xlu0 %1046, %v835
    %v1048 = vpop.permute.xlu0 %1047
    %v1050 = vadd.f32 %v1036, %v1043
    %v1051 = vadd.f32 %v1037, %v1043
    %v1052 = vadd.f32 %v1038, %v1048
    %v1053 = vadd.f32 %v1039, %v1048
    %v1054 = vmax.f32 %v1050, 0.0
    %v1055 = vmax.f32 %v1051, 0.0
    %v1056 = vmax.f32 %v1052, 0.0
    %v1057 = vmax.f32 %v1053, 0.0
    %v1058 = vld [vmem:[%s1 + $0x100] sm:$0x1]
    %v1059 = vld [vmem:[%s1 + $0x101] sm:$0x1]
    %1061 = vset.pattern.permute.xlu0 0
    %1062 = vperm.xlu0 %1061, %v1059
    %v1063 = vpop.permute.xlu0 %1062
    %v1066 = vsel %vm310, %v1058, 0
    %1068 = vmatprep.subr.mxu0 0.0
    %1069 = vmatpush1.msra.mxu0 0.0
    %1070 = vmatprep.subr.mxu0 0.0
    %1071 = vmatpush1.msra.mxu0 0.0
    %1072 = vmatprep.subr.mxu0 0.0
    %1073 = vmatpush1.msra.mxu0 0.0
    %1074 = vmatprep.subr.mxu0 0.0
    %1075 = vmatpush1.msra.mxu0 0.0
    %1076 = vmatprep.subr.mxu0 0.0
    %1077 = vmatpush1.msra.mxu0 0.0
    %1078 = vmatprep.subr.mxu0 0.0
    %1079 = vmatpush1.msra.mxu0 0.0
    %1080 = vmatprep.subr.mxu0 0.0
    %1081 = vmatpush1.msra.mxu0 0.0
    %1082 = vmatprep.subr.mxu0 0.0
    %1083 = vmatpush1.msra.mxu0 0.0
    %1084 = vmatprep.subr.mxu0 0.0
    %1085 = vmatpush1.msra.mxu0 0.0
    %1086 = vmatprep.subr.mxu0 0.0
    %1087 = vmatpush1.msra.mxu0 0.0
    %1088 = vmatprep.subr.mxu0 0.0
    %1089 = vmatpush1.msra.mxu0 0.0
    %1090 = vmatprep.subr.mxu0 0.0
    %1091 = vmatpush1.msra.mxu0 0.0
    %1092 = vmatprep.subr.mxu0 0.0
    %1093 = vmatpush1.msra.mxu0 0.0
    %1094 = vmatprep.subr.mxu0 0.0
    %1095 = vmatpush1.msra.mxu0 0.0
    %1096 = vmatprep.subr.mxu0 %v1057
    %1097 = vmatpush1.msra.mxu0 %v1056
    %1098 = vmatprep.subr.mxu0 %v1055
    %1099 = vmatpush1.msra.mxu0 %v1054
    %1100 = vmatprep.subr.mxu0 0.0
    %1101 = vmatpush2.msra.mxu0 0.0
    %1102 = vmatprep.subr.mxu0 0.0
    %1103 = vmatpush2.msra.mxu0 0.0
    %1104 = vmatprep.subr.mxu0 0.0
    %1105 = vmatpush2.msra.mxu0 0.0
    %1106 = vmatprep.subr.mxu0 0.0
    %1107 = vmatpush2.msra.mxu0 0.0
    %1108 = vmatprep.subr.mxu0 0.0
    %1109 = vmatpush2.msra.mxu0 0.0
    %1110 = vmatprep.subr.mxu0 0.0
    %1111 = vmatpush2.msra.mxu0 0.0
    %1112 = vmatprep.subr.mxu0 0.0
    %1113 = vmatpush2.msra.mxu0 0.0
    %1114 = vmatprep.subr.mxu0 0.0
    %1115 = vmatpush2.msra.mxu0 0.0
    %1116 = vmatprep.subr.mxu0 0.0
    %1117 = vmatpush2.msra.mxu0 0.0
    %1118 = vmatprep.subr.mxu0 0.0
    %1119 = vmatpush2.msra.mxu0 0.0
    %1120 = vmatprep.subr.mxu0 0.0
    %1121 = vmatpush2.msra.mxu0 0.0
    %1122 = vmatprep.subr.mxu0 0.0
    %1123 = vmatpush2.msra.mxu0 0.0
    %1124 = vmatprep.subr.mxu0 0.0
    %1125 = vmatpush2.msra.mxu0 0.0
    %1126 = vmatprep.subr.mxu0 0.0
    %1127 = vmatpush2.msra.mxu0 0.0
    %1128 = vmatprep.subr.mxu0 0.0
    %1129 = vmatpush2.msra.mxu0 0.0
    %1130 = vmatprep.subr.mxu0 0.0
    %1131 = vmatpush2.msra.mxu0 0.0
    %1132 = vmatprep.mubr.f32.mxu0 0.0
    %1133 = vmatmul.mubr.f32.gmra.mxu0 %v1066
    %v1134 = vpop.f32.mrf.mxu0
    %v1135 = vadd.f32 %v1063, %v1134
    %v1136 = vpop.f32.mrf.mxu0
    %v1137 = vadd.f32 %v1063, %v1136
    %1138 = vdwg.mxu0
    %v1141 = vcombine.low %v1135, %v1137
    %v1143 = vunpack.c.l.s4 1966171168
    %v1144 = vunpack.c.0.s8 %v1143
    %v1145 = vlaneseq
    %v1146 = vshrl.u32 %v1145, 7
    %v1147 = vsub.s32 %v1144, %v1146
    %v1148 = vrot.slane %v1141, %v1147
    %v1150 = vunpack.c.l.s4 1966171168
    %v1151 = vunpack.c.0.s8 %v1150
    %v1152 = vlaneseq
    %v1153 = vshrl.u32 %v1152, 7
    %v1154 = vsub.s32 %v1151, %v1153
    %v1155 = vrot.slane %v1148, %v1154
    %v1157 = vlaneseq
    %vm1158 = vcmp.ge.s32.totalorder %v1157, 0
    %vm1159 = vcmp.lt.s32.totalorder %v1157, 256
    %vm1160 = vmand %vm1158, %vm1159
    %1161 = vst.msk [vmem:[#allocation2] sm:$0x3] %vm1160, %v1155
    // Predicated region
    $region10: #{tpu_custom_call.1} parent=1 // pred_check
      _
    $region11: #{tpu_custom_call.1} parent=1 // pred_check_branch
      %1163 = sbr.rel (0) target = $region13
    $region12: #{tpu_custom_call.1} parent=1 // pred_region
      %s1165 = ssub.s32 32, 32
      %1166 = vsyncadd [#allocation3], %s1165
      %s1168 = sshll.u32 [#allocation2], 4
      %s1169 = int_to_ptr.vmem [resolvable:$true] %s1168
      %1171 = dma.vmem_to_hbm [thread:$0]  %s1169, 32, %s2, [#allocation3]
    $region13: #{tpu_custom_call.1} parent=1 // pred_fallthru
      _
    // Predicated region
    $region14: #{tpu_custom_call.1} parent=1 // pred_check
      _
    $region15: #{tpu_custom_call.1} parent=1 // pred_check_branch
      %1173 = sbr.rel (0) target = $region17
    $region16: #{tpu_custom_call.1} parent=1 // pred_region
      %1174 = dma.done [#allocation3], 32
    $region17: #{tpu_custom_call.1} parent=1 // pred_fallthru
      _
    %1175 = vsyncpa [#allocation3], 1

</llo_original>
